<compile_context>
chip_gen: v6e
topology: v6e:2x2x1
jax: 0.10.0
libtpu: 0.0.40
codegen_flags: <defaults>
</compile_context>

<pallas_src>
import jax
import jax.numpy as jnp
from jax.experimental import pallas as pl
from jax.experimental.pallas import tpu as pltpu


_CHUNK = 128           # positions per inner-loop step; (128, 32) f32 intermediate = 16 vregs
_MAX_ROW_TILE = 8192   # positions per grid step; <= ~16 MiB double-buffered VMEM at C<=8 lanes
_SPLIT_MIN = 4096      # above this, force grid >= 2 so both v7x TensorCores get work


def _round_up(a, b):
    return ((a + b - 1) // b) * b


def _make_kernel(num_layers, chunk, n_full_chunks, rem, row_tile, n_total, compute_dtype):
    """Fused pointwise-MLP kernel.

    Refs: x (row_tile, C_in), then [w_l (C_l, C_{l-1}), b_l (1, C_l)] per layer,
    then out (row_tile, C_out).  Weights are in native Conv1d (out, in) layout.
    """
    dims = (((1,), (1,)), ((), ()))   # contract dim 1 of both operands: h @ w.T

    def kernel(*refs):
        x_ref = refs[0]            # (row_tile, C_in) -- natural, position-major layout
        out_ref = refs[-1]         # (row_tile, C_out)
        param_refs = refs[1:-1]    # w0, b0, w1, b1, ...

        # Tiny weights/biases: load once per grid step, resident across the chunk loop.
        ws = [param_refs[2 * l][...].astype(compute_dtype) for l in range(num_layers)]
        bs = [param_refs[2 * l + 1][...].astype(jnp.float32) for l in range(num_layers)]

        # Valid positions in this block (N is static at trace time -> no scalar prefetch).
        valid = n_total - pl.program_id(0) * row_tile

        def do_chunk(start, size):
            h = x_ref[pl.ds(start, size), :].astype(compute_dtype)          # (size, C_in)
            for l in range(num_layers):
                acc = jax.lax.dot_general(h, ws[l], dims,
                                          preferred_element_type=jnp.float32)
                acc = acc + bs[l]                                           # (size, C_l) f32
                acc = jnp.maximum(acc, 0.1 * acc)                           # LeakyReLU(0.1)
                h = acc if l == num_layers - 1 else acc.astype(compute_dtype)
            out_ref[pl.ds(start, size), :] = h.astype(out_ref.dtype)

        if n_full_chunks > 0:
            def body(c, carry):
                start = pl.multiple_of(c * chunk, chunk)

                # Skip chunks past the valid extent of a cdiv-partial last block
                # (Pallas masks the HBM writeback; this just avoids wasted MXU/VPU work).
                @pl.when(start < valid)
                def _():
                    do_chunk(start, chunk)

                return carry

            # unroll=2: two independent chunks in flight per iteration.
            jax.lax.fori_loop(0, n_full_chunks, body, 0, unroll=2)

        if rem > 0:
            # Static ragged tail inside the (single, full-extent) block -- no HBM padding copy.
            tail = n_full_chunks * chunk

            @pl.when(tail < valid)
            def _():
                do_chunk(tail, rem)

    return kernel


def fully_1x1_conv_coder(x, weights, biases, *, row_tile=None, use_bf16=False):
    """x: (B, L, C_in); weights[i]: (out_i, in_i) as in nn.Conv1d(..., 1); biases[i]: (out_i,)."""
    B, L, C_in = x.shape
    N = B * L
    num_layers = len(weights)
    C_out = weights[-1].shape[0]

    # No layout plumbing: collapsing leading dims is free, and the kernel consumes/produces the
    # module's natural layout, so there is no standalone HBM transpose pass on either side.
    x2d = x.reshape(N, C_in)

    if row_tile is None:
        if N >= 2 * _MAX_ROW_TILE:
            row_tile = _MAX_ROW_TILE                         # long grid; all cores stay busy
        elif N >= _SPLIT_MIN:
            row_tile = _round_up((N + 1) // 2, 256)          # grid >= 2 -> both v7x TCs get work
        else:
            row_tile = N                                     # one full-extent block
    num_blocks = pl.cdiv(N, row_tile)

    n_full_chunks = row_tile // _CHUNK
    rem = row_tile % _CHUNK
    compute_dtype = jnp.bfloat16 if use_bf16 else jnp.float32

    params = []
    in_specs = [pl.BlockSpec((row_tile, C_in), lambda i: (i, 0))]
    for w, b in zip(weights, biases):
        b2 = b.reshape(1, -1)          # (1, out): broadcasts over positions inside the kernel
        params += [w, b2]              # native (out, in) Conv1d layout -- no transpose needed
        in_specs += [
            pl.BlockSpec(w.shape, lambda i: (0, 0), pipeline_mode=pl.Buffered(1)),
            pl.BlockSpec(b2.shape, lambda i: (0, 0), pipeline_mode=pl.Buffered(1)),
        ]

    out = pl.pallas_call(
        _make_kernel(num_layers, _CHUNK, n_full_chunks, rem, row_tile, N, compute_dtype),
        out_shape=jax.ShapeDtypeStruct((N, C_out), x.dtype),
        grid=(num_blocks,),
        in_specs=in_specs,
        out_specs=pl.BlockSpec((row_tile, C_out), lambda i: (i, 0)),
        compiler_params=pltpu.CompilerParams(
            dimension_semantics=("parallel",),
            vmem_limit_bytes=32 * 1024 * 1024,
        ),
    )(x2d, *params)

    # Free leading-dim reshape back to the module's (B, L, C_out) interface.
    return out.reshape(B, L, C_out)


def _reference(x, weights, biases):
    B, L, _ = x.shape
    h = x.reshape(B * L, -1).astype(jnp.float32)
    for w, b in zip(weights, biases):
        h = h @ jnp.transpose(w).astype(jnp.float32) + b.astype(jnp.float32)
        h = jnp.where(h > 0, h, 0.1 * h)
    return h.reshape(B, L, -1)


if __name__ == "__main__":
    # Module config: Fully1x1ConvCoder(in_channels=4, out_channels=8, layer_dims=[32, 32])
    in_channels, out_channels, layer_dims = 4, 8, [32, 32]
    in_out_dims = [in_channels] + layer_dims + [out_channels]

    key = jax.random.PRNGKey(0)
    keys = jax.random.split(key, 2 * (len(in_out_dims) - 1) + 2)

    weights, biases = [], []
    for i, (ci, co) in enumerate(zip(in_out_dims[:-1], in_out_dims[1:])):
        # Deterministic synthetic init (shapes match nn.Conv1d(ci, co, 1): weight (co, ci, 1))
        w = 0.1 * jax.random.normal(keys[2 * i], (co, ci), dtype=jnp.float32)
        b = 0.05 * jax.random.normal(keys[2 * i + 1], (co,), dtype=jnp.float32)
        weights.append(w)
        biases.append(b)

    # 1) Small shape matching the module's (batch=2, seq=16, in_channels=4) convention.
    x_small = jax.random.normal(keys[-2], (2, 16, in_channels), dtype=jnp.float32)
    y = jax.block_until_ready(fully_1x1_conv_coder(x_small, weights, biases))
    y_ref = _reference(x_small, weights, biases)
    assert y.shape == (2, 16, out_channels)
    assert jnp.max(jnp.abs(y - y_ref)) < 1e-4

    # 2) Multi-block case (review's correctness concern): N = 3*5525 = 16575 >= 2*_MAX_ROW_TILE
    #    with an odd remainder -- exercises the unrolled full-chunk loop, the cdiv-partial last
    #    block, and the dead-chunk pl.when gating.
    x_big = jax.random.normal(keys[-1], (3, 5525, in_channels), dtype=jnp.float32)
    y_big = jax.block_until_ready(fully_1x1_conv_coder(x_big, weights, biases))
    y_big_ref = _reference(x_big, weights, biases)
    assert y_big.shape == (3, 5525, out_channels)
    assert jnp.max(jnp.abs(y_big - y_big_ref)) < 1e-4

    # 3) Optional bf16 matmul-operand path (accuracy-gated per the review; looser tolerance).
    y_bf16 = jax.block_until_ready(
        fully_1x1_conv_coder(x_small, weights, biases, use_bf16=True))
    assert y_bf16.shape == (2, 16, out_channels)
    assert jnp.max(jnp.abs(y_bf16 - y_ref)) < 2e-2

    print("KERNEL_OK")
</pallas_src>

<mosaic_0001>
module attributes {stable_mosaic.version = 11 : i64} {
  func.func @kernel(%arg0: i32, %arg1: memref<32x4xf32, #tpu.memory_space<vmem>>, %arg2: memref<32x4xf32, #tpu.memory_space<vmem>>, %arg3: memref<1x32xf32, #tpu.memory_space<vmem>>, %arg4: memref<32x32xf32, #tpu.memory_space<vmem>>, %arg5: memref<1x32xf32, #tpu.memory_space<vmem>>, %arg6: memref<8x32xf32, #tpu.memory_space<vmem>>, %arg7: memref<1x8xf32, #tpu.memory_space<vmem>>, %arg8: memref<32x8xf32, #tpu.memory_space<vmem>>) attributes {dimension_semantics = [#tpu.dimension_semantics<parallel>], iteration_bounds = array<i64: 1>, scalar_prefetch = 0 : i64, scratch_operands = 0 : i64, tpu.core_type = #tpu.core_type<tc>, window_params = [{transform_indices = @transform_0, window_bounds = array<i64: 32, 4>}, {pipeline_mode = #tpu.pipeline_mode<synchronous>, transform_indices = @transform_1, window_bounds = array<i64: 32, 4>}, {pipeline_mode = #tpu.pipeline_mode<synchronous>, transform_indices = @transform_2, window_bounds = array<i64: 1, 32>}, {pipeline_mode = #tpu.pipeline_mode<synchronous>, transform_indices = @transform_3, window_bounds = array<i64: 32, 32>}, {pipeline_mode = #tpu.pipeline_mode<synchronous>, transform_indices = @transform_4, window_bounds = array<i64: 1, 32>}, {pipeline_mode = #tpu.pipeline_mode<synchronous>, transform_indices = @transform_5, window_bounds = array<i64: 8, 32>}, {pipeline_mode = #tpu.pipeline_mode<synchronous>, transform_indices = @transform_6, window_bounds = array<i64: 1, 8>}, {transform_indices = @transform_7, window_bounds = array<i64: 32, 8>}]} {
    %c0 = arith.constant 0 : index
    %c0_0 = arith.constant 0 : index
    %0 = vector.load %arg2[%c0, %c0_0] : memref<32x4xf32, #tpu.memory_space<vmem>>, vector<32x4xf32>
    %c0_1 = arith.constant 0 : index
    %c0_2 = arith.constant 0 : index
    %1 = vector.load %arg4[%c0_1, %c0_2] : memref<32x32xf32, #tpu.memory_space<vmem>>, vector<32x32xf32>
    %c0_3 = arith.constant 0 : index
    %c0_4 = arith.constant 0 : index
    %2 = vector.load %arg6[%c0_3, %c0_4] : memref<8x32xf32, #tpu.memory_space<vmem>>, vector<8x32xf32>
    %c0_5 = arith.constant 0 : index
    %c0_6 = arith.constant 0 : index
    %3 = vector.load %arg3[%c0_5, %c0_6] : memref<1x32xf32, #tpu.memory_space<vmem>>, vector<1x32xf32>
    %c0_7 = arith.constant 0 : index
    %c0_8 = arith.constant 0 : index
    %4 = vector.load %arg5[%c0_7, %c0_8] : memref<1x32xf32, #tpu.memory_space<vmem>>, vector<1x32xf32>
    %c0_9 = arith.constant 0 : index
    %c0_10 = arith.constant 0 : index
    %5 = vector.load %arg7[%c0_9, %c0_10] : memref<1x8xf32, #tpu.memory_space<vmem>>, vector<1x8xf32>
    %c32_i32 = arith.constant 32 : i32
    %6 = arith.muli %arg0, %c32_i32 : i32
    %c32_i32_11 = arith.constant 32 : i32
    %7 = arith.subi %c32_i32_11, %6 : i32
    %c0_i32 = arith.constant 0 : i32
    %8 = arith.cmpi sgt, %7, %c0_i32 : i32
    %9 = arith.extui %8 : i1 to i32
    %c0_i32_12 = arith.constant 0 : i32
    %10 = arith.cmpi ne, %9, %c0_i32_12 : i32
    scf.if %10 {
      %c0_13 = arith.constant 0 : index
      %c0_14 = arith.constant 0 : index
      %11 = vector.load %arg1[%c0_13, %c0_14] : memref<32x4xf32, #tpu.memory_space<vmem>>, vector<32x4xf32>
      %cst = arith.constant dense<0.000000e+00> : vector<32x32xf32>
      %12 = tpu.matmul %11, %0, %cst {dimension_numbers = #tpu.dot_dimension_numbers<[1], [1], [0], [0], [0, 0, 1, 0], [], []>} : vector<32x4xf32>, vector<32x4xf32>, vector<32x32xf32> -> vector<32x32xf32>
      %13 = vector.broadcast %3 : vector<1x32xf32> to vector<32x32xf32>
      %14 = arith.addf %12, %13 : vector<32x32xf32>
      %cst_15 = arith.constant 1.000000e-01 : f32
      %15 = vector.broadcast %cst_15 : f32 to vector<32x32xf32>
      %16 = arith.mulf %15, %14 : vector<32x32xf32>
      %17 = arith.maximumf %14, %16 : vector<32x32xf32>
      %cst_16 = arith.constant dense<0.000000e+00> : vector<32x32xf32>
      %18 = tpu.matmul %17, %1, %cst_16 {dimension_numbers = #tpu.dot_dimension_numbers<[1], [1], [0], [0], [0, 0, 1, 0], [], []>} : vector<32x32xf32>, vector<32x32xf32>, vector<32x32xf32> -> vector<32x32xf32>
      %19 = vector.broadcast %4 : vector<1x32xf32> to vector<32x32xf32>
      %20 = arith.addf %18, %19 : vector<32x32xf32>
      %cst_17 = arith.constant 1.000000e-01 : f32
      %21 = vector.broadcast %cst_17 : f32 to vector<32x32xf32>
      %22 = arith.mulf %21, %20 : vector<32x32xf32>
      %23 = arith.maximumf %20, %22 : vector<32x32xf32>
      %cst_18 = arith.constant dense<0.000000e+00> : vector<32x8xf32>
      %24 = tpu.matmul %23, %2, %cst_18 {dimension_numbers = #tpu.dot_dimension_numbers<[1], [1], [0], [0], [0, 0, 1, 0], [], []>} : vector<32x32xf32>, vector<8x32xf32>, vector<32x8xf32> -> vector<32x8xf32>
      %25 = vector.broadcast %5 : vector<1x8xf32> to vector<32x8xf32>
      %26 = arith.addf %24, %25 : vector<32x8xf32>
      %cst_19 = arith.constant 1.000000e-01 : f32
      %27 = vector.broadcast %cst_19 : f32 to vector<32x8xf32>
      %28 = arith.mulf %27, %26 : vector<32x8xf32>
      %29 = arith.maximumf %26, %28 : vector<32x8xf32>
      %c0_20 = arith.constant 0 : index
      %c0_21 = arith.constant 0 : index
      %30 = vector.load %arg8[%c0_20, %c0_21] : memref<32x8xf32, #tpu.memory_space<vmem>>, vector<32x8xf32>
      tpu.vector_store %arg8[%c0_20, %c0_21], %29 {strides = array<i32>} : memref<32x8xf32, #tpu.memory_space<vmem>>, vector<32x8xf32>,
    } else {
    }
    return
  }
  func.func @transform_0(%arg0: i32) -> (i32, i32) {
    %c0_i32 = arith.constant 0 : i32
    %c0_i32_0 = arith.constant 0 : i32
    return %arg0, %c0_i32 : i32, i32
  }
  func.func @transform_1(%arg0: i32) -> (i32, i32) {
    %c0_i32 = arith.constant 0 : i32
    %c0_i32_0 = arith.constant 0 : i32
    %c0_i32_1 = arith.constant 0 : i32
    return %c0_i32, %c0_i32_0 : i32, i32
  }
  func.func @transform_2(%arg0: i32) -> (i32, i32) {
    %c0_i32 = arith.constant 0 : i32
    %c0_i32_0 = arith.constant 0 : i32
    %c0_i32_1 = arith.constant 0 : i32
    return %c0_i32, %c0_i32_0 : i32, i32
  }
  func.func @transform_3(%arg0: i32) -> (i32, i32) {
    %c0_i32 = arith.constant 0 : i32
    %c0_i32_0 = arith.constant 0 : i32
    %c0_i32_1 = arith.constant 0 : i32
    return %c0_i32, %c0_i32_0 : i32, i32
  }
  func.func @transform_4(%arg0: i32) -> (i32, i32) {
    %c0_i32 = arith.constant 0 : i32
    %c0_i32_0 = arith.constant 0 : i32
    %c0_i32_1 = arith.constant 0 : i32
    return %c0_i32, %c0_i32_0 : i32, i32
  }
  func.func @transform_5(%arg0: i32) -> (i32, i32) {
    %c0_i32 = arith.constant 0 : i32
    %c0_i32_0 = arith.constant 0 : i32
    %c0_i32_1 = arith.constant 0 : i32
    return %c0_i32, %c0_i32_0 : i32, i32
  }
  func.func @transform_6(%arg0: i32) -> (i32, i32) {
    %c0_i32 = arith.constant 0 : i32
    %c0_i32_0 = arith.constant 0 : i32
    %c0_i32_1 = arith.constant 0 : i32
    return %c0_i32, %c0_i32_0 : i32, i32
  }
  func.func @transform_7(%arg0: i32) -> (i32, i32) {
    %c0_i32 = arith.constant 0 : i32
    %c0_i32_0 = arith.constant 0 : i32
    return %arg0, %c0_i32 : i32, i32
  }
}

</mosaic_0001>

<llo_original>
// kernel: tpu_custom_call.1
$region0: #{tpu_custom_call.1}
  #allocation0 [shape = 'u32[]', space=smem, size = 0x4, offset = 0x4, fixed_abs, tag = 'smem constant byte address 0x4 - core index']
  #allocation1 [shape = 'u32[144,128]{1,0:T(1,128)}', space=vmem, size = 0x12000, scoped, tag = 'internal scratch']
  %s0 = inlined_call_operand.vmem [shape: f32[32,4], index: 0, kind: input, shape index: {}]
  %s1 = inlined_call_operand.vmem [shape: f32[32,4], index: 1, kind: input, shape index: {}]
  %s2 = inlined_call_operand.vmem [shape: f32[1,32], index: 2, kind: input, shape index: {}]
  %s3 = inlined_call_operand.vmem [shape: f32[32,32], index: 3, kind: input, shape index: {}]
  %s4 = inlined_call_operand.vmem [shape: f32[1,32], index: 4, kind: input, shape index: {}]
  %s5 = inlined_call_operand.vmem [shape: f32[8,32], index: 5, kind: input, shape index: {}]
  %s6 = inlined_call_operand.vmem [shape: f32[1,8], index: 6, kind: input, shape index: {}]
  %s7 = inlined_call_operand.vmem [shape: f32[32,8], index: 7, kind: output, shape index: {}]
  %s8 = sld [smem:[#allocation0]]
  $region42: #{tpu_custom_call.1} parent=0
    _
  %s10 = ssub.s32 1, %s8
  %s11 = scalar_select 0, %s10, %s8
  // Predicated region
  $region2: #{tpu_custom_call.1} parent=0 // pred_check
    _
  $region3: #{tpu_custom_call.1} parent=0 // pred_check_branch
    %13 = sbr.rel (0) target = $region5
  $region4: #{tpu_custom_call.1} parent=0 // pred_region
    _
  $region5: #{tpu_custom_call.1} parent=0 // pred_fallthru
    _
  // Predicated region
  $region6: #{tpu_custom_call.1} parent=0 // pred_check
    _
  $region7: #{tpu_custom_call.1} parent=0 // pred_check_branch
    %15 = sbr.rel (0) target = $region9
  $region8: #{tpu_custom_call.1} parent=0 // pred_region
    _
  $region9: #{tpu_custom_call.1} parent=0 // pred_fallthru
    _
  // Predicated region
  $region10: #{tpu_custom_call.1} parent=0 // pred_check
    _
  $region11: #{tpu_custom_call.1} parent=0 // pred_check_branch
    %17 = sbr.rel (0) target = $region13
  $region12: #{tpu_custom_call.1} parent=0 // pred_region
    _
  $region13: #{tpu_custom_call.1} parent=0 // pred_fallthru
    _
  // Predicated region
  $region14: #{tpu_custom_call.1} parent=0 // pred_check
    _
  $region15: #{tpu_custom_call.1} parent=0 // pred_check_branch
    %19 = sbr.rel (0) target = $region17
  $region16: #{tpu_custom_call.1} parent=0 // pred_region
    _
  $region17: #{tpu_custom_call.1} parent=0 // pred_fallthru
    _
  // Predicated region
  $region18: #{tpu_custom_call.1} parent=0 // pred_check
    _
  $region19: #{tpu_custom_call.1} parent=0 // pred_check_branch
    %21 = sbr.rel (0) target = $region21
  $region20: #{tpu_custom_call.1} parent=0 // pred_region
    _
  $region21: #{tpu_custom_call.1} parent=0 // pred_fallthru
    _
  // Predicated region
  $region22: #{tpu_custom_call.1} parent=0 // pred_check
    _
  $region23: #{tpu_custom_call.1} parent=0 // pred_check_branch
    %23 = sbr.rel (0) target = $region25
  $region24: #{tpu_custom_call.1} parent=0 // pred_region
    _
  $region25: #{tpu_custom_call.1} parent=0 // pred_fallthru
    _
  // Predicated region
  $region26: #{tpu_custom_call.1} parent=0 // pred_check
    _
  $region27: #{tpu_custom_call.1} parent=0 // pred_check_branch
    %25 = sbr.rel (0) target = $region29
  $region28: #{tpu_custom_call.1} parent=0 // pred_region
    _
  $region29: #{tpu_custom_call.1} parent=0 // pred_fallthru
    _
  %v26 = vld [vmem:[%s1] sm:$0xff]
  %v27 = vld [vmem:[%s1 + $0x8] sm:$0xff]
  %v28 = vld [vmem:[%s1 + $0x10] sm:$0xff]
  %v29 = vld [vmem:[%s1 + $0x18] sm:$0xff]
  %v30 = vld [vmem:[%s3] sm:$0xff]
  %v31 = vld [vmem:[%s3 + $0x8] sm:$0xff]
  %v32 = vld [vmem:[%s3 + $0x10] sm:$0xff]
  %v33 = vld [vmem:[%s3 + $0x18] sm:$0xff]
  %v34 = vld [vmem:[%s5] sm:$0xff]
  %v35 = vld [vmem:[%s2] sm:$0x1]
  %v36 = vld [vmem:[%s4] sm:$0x1]
  %v37 = vld [vmem:[%s6] sm:$0x1]
  %s38 = smul.u32 0, 32
  %s39 = ssub.s32 32, %s38
  %p40 = scmp.gt.s32.totalorder %s39, 0
  // Predicated region
  $region30: #{tpu_custom_call.1} parent=0 // pred_check
    %p41 = pneg %p40
  $region31: #{tpu_custom_call.1} parent=0 // pred_check_branch
    %43 = sbr.rel (%p41) target = $region33
  $region32: #{tpu_custom_call.1} parent=0 // pred_region
    %v44 = vld [vmem:[%s0] sm:$0xff]
    %v45 = vld [vmem:[%s0 + $0x8] sm:$0xff]
    %v46 = vld [vmem:[%s0 + $0x10] sm:$0xff]
    %v47 = vld [vmem:[%s0 + $0x18] sm:$0xff]
    %v49 = vlaneseq
    %v50 = vshrl.u32 %v49, 7
    %v51 = vsub.s32 0, %v50
    %v52 = vrot.slane %v35, %v51
    %vm54 = vcmask 31744
    %v56 = vsel %vm54, %v44, 0
    %v59 = vsel %vm54, %v45, 0
    %v62 = vsel %vm54, %v46, 0
    %v65 = vsel %vm54, %v47, 0
    %v68 = vsel %vm54, %v26, 0
    %v71 = vsel %vm54, %v27, 0
    %v74 = vsel %vm54, %v28, 0
    %v77 = vsel %vm54, %v29, 0
    %79 = vmatprep.subr.mxu0 0.0
    %80 = vmatpush1.xpose.msra.mxu0 0.0
    %81 = vmatprep.subr.mxu0 0.0
    %82 = vmatpush1.xpose.msra.mxu0 0.0
    %83 = vmatprep.subr.mxu0 0.0
    %84 = vmatpush1.xpose.msra.mxu0 0.0
    %85 = vmatprep.subr.mxu0 0.0
    %86 = vmatpush1.xpose.msra.mxu0 0.0
    %87 = vmatprep.subr.mxu0 0.0
    %88 = vmatpush1.xpose.msra.mxu0 0.0
    %89 = vmatprep.subr.mxu0 0.0
    %90 = vmatpush1.xpose.msra.mxu0 0.0
    %91 = vmatprep.subr.mxu0 0.0
    %92 = vmatpush1.xpose.msra.mxu0 0.0
    %93 = vmatprep.subr.mxu0 0.0
    %94 = vmatpush1.xpose.msra.mxu0 0.0
    %95 = vmatprep.subr.mxu0 0.0
    %96 = vmatpush1.xpose.msra.mxu0 0.0
    %97 = vmatprep.subr.mxu0 0.0
    %98 = vmatpush1.xpose.msra.mxu0 0.0
    %99 = vmatprep.subr.mxu0 0.0
    %100 = vmatpush1.xpose.msra.mxu0 0.0
    %101 = vmatprep.subr.mxu0 0.0
    %102 = vmatpush1.xpose.msra.mxu0 0.0
    %103 = vmatprep.subr.mxu0 0.0
    %104 = vmatpush1.xpose.msra.mxu0 %v77
    %105 = vmatprep.subr.mxu0 0.0
    %106 = vmatpush1.xpose.msra.mxu0 %v74
    %107 = vmatprep.subr.mxu0 0.0
    %108 = vmatpush1.xpose.msra.mxu0 %v71
    %109 = vmatprep.subr.mxu0 0.0
    %110 = vmatpush1.xpose.msra.mxu0 %v68
    %111 = vmatprep.subr.mxu0 0.0
    %112 = vmatpush2.xpose.msra.mxu0 0.0
    %113 = vmatprep.subr.mxu0 0.0
    %114 = vmatpush2.xpose.msra.mxu0 0.0
    %115 = vmatprep.subr.mxu0 0.0
    %116 = vmatpush2.xpose.msra.mxu0 0.0
    %117 = vmatprep.subr.mxu0 0.0
    %118 = vmatpush2.xpose.msra.mxu0 0.0
    %119 = vmatprep.subr.mxu0 0.0
    %120 = vmatpush2.xpose.msra.mxu0 0.0
    %121 = vmatprep.subr.mxu0 0.0
    %122 = vmatpush2.xpose.msra.mxu0 0.0
    %123 = vmatprep.subr.mxu0 0.0
    %124 = vmatpush2.xpose.msra.mxu0 0.0
    %125 = vmatprep.subr.mxu0 0.0
    %126 = vmatpush2.xpose.msra.mxu0 0.0
    %127 = vmatprep.subr.mxu0 0.0
    %128 = vmatpush2.xpose.msra.mxu0 0.0
    %129 = vmatprep.subr.mxu0 0.0
    %130 = vmatpush2.xpose.msra.mxu0 0.0
    %131 = vmatprep.subr.mxu0 0.0
    %132 = vmatpush2.xpose.msra.mxu0 0.0
    %133 = vmatprep.subr.mxu0 0.0
    %134 = vmatpush2.xpose.msra.mxu0 0.0
    %135 = vmatprep.subr.mxu0 0.0
    %136 = vmatpush2.xpose.msra.mxu0 0.0
    %137 = vmatprep.subr.mxu0 0.0
    %138 = vmatpush2.xpose.msra.mxu0 0.0
    %139 = vmatprep.subr.mxu0 0.0
    %140 = vmatpush2.xpose.msra.mxu0 0.0
    %141 = vmatprep.subr.mxu0 0.0
    %142 = vmatpush2.xpose.msra.mxu0 0.0
    %143 = vmatprep.mubr.f32.mxu0 0.0
    %144 = vmatmul.mubr.f32.gmra.mxu0 %v56
    %v145 = vpop.f32.mrf.mxu0
    %v146 = vadd.f32 %v52, %v145
    %v147 = vpop.f32.mrf.mxu0
    %148 = vmatprep.mubr.f32.mxu0 0.0
    %149 = vmatmul.mubr.f32.gmra.mxu0 %v59
    %v150 = vpop.f32.mrf.mxu0
    %v151 = vadd.f32 %v52, %v150
    %v152 = vpop.f32.mrf.mxu0
    %153 = vmatprep.mubr.f32.mxu0 0.0
    %154 = vmatmul.mubr.f32.gmra.mxu0 %v62
    %v155 = vpop.f32.mrf.mxu0
    %v156 = vadd.f32 %v52, %v155
    %v157 = vpop.f32.mrf.mxu0
    %158 = vmatprep.mubr.f32.mxu0 0.0
    %159 = vmatmul.mubr.f32.gmra.mxu0 %v65
    %v160 = vpop.f32.mrf.mxu0
    %v161 = vadd.f32 %v52, %v160
    %v162 = vpop.f32.mrf.mxu0
    %163 = vdwg.mxu0
    %v164 = vmul.f32 %v146, 0.1
    %v165 = vmul.f32 %v151, 0.1
    %v166 = vmul.f32 %v156, 0.1
    %v167 = vmul.f32 %v161, 0.1
    %v168 = vmax.f32 %v146, %v164
    %v169 = vmax.f32 %v151, %v165
    %v170 = vmax.f32 %v156, %v166
    %v171 = vmax.f32 %v161, %v167
    %v173 = vlaneseq
    %v174 = vshrl.u32 %v173, 7
    %v175 = vsub.s32 0, %v174
    %v176 = vrot.slane %v36, %v175
    %vm178 = vcmask 261120
    %v180 = vsel %vm178, %v168, 0
    %v183 = vsel %vm178, %v169, 0
    %v186 = vsel %vm178, %v170, 0
    %v189 = vsel %vm178, %v171, 0
    %v192 = vsel %vm178, %v30, 0
    %v195 = vsel %vm178, %v31, 0
    %v198 = vsel %vm178, %v32, 0
    %v201 = vsel %vm178, %v33, 0
    %203 = vmatprep.subr.mxu0 0.0
    %204 = vmatpush1.xpose.msra.mxu0 0.0
    %205 = vmatprep.subr.mxu0 0.0
    %206 = vmatpush1.xpose.msra.mxu0 0.0
    %207 = vmatprep.subr.mxu0 0.0
    %208 = vmatpush1.xpose.msra.mxu0 0.0
    %209 = vmatprep.subr.mxu0 0.0
    %210 = vmatpush1.xpose.msra.mxu0 0.0
    %211 = vmatprep.subr.mxu0 0.0
    %212 = vmatpush1.xpose.msra.mxu0 0.0
    %213 = vmatprep.subr.mxu0 0.0
    %214 = vmatpush1.xpose.msra.mxu0 0.0
    %215 = vmatprep.subr.mxu0 0.0
    %216 = vmatpush1.xpose.msra.mxu0 0.0
    %217 = vmatprep.subr.mxu0 0.0
    %218 = vmatpush1.xpose.msra.mxu0 0.0
    %219 = vmatprep.subr.mxu0 0.0
    %220 = vmatpush1.xpose.msra.mxu0 0.0
    %221 = vmatprep.subr.mxu0 0.0
    %222 = vmatpush1.xpose.msra.mxu0 0.0
    %223 = vmatprep.subr.mxu0 0.0
    %224 = vmatpush1.xpose.msra.mxu0 0.0
    %225 = vmatprep.subr.mxu0 0.0
    %226 = vmatpush1.xpose.msra.mxu0 0.0
    %227 = vmatprep.subr.mxu0 0.0
    %228 = vmatpush1.xpose.msra.mxu0 %v201
    %229 = vmatprep.subr.mxu0 0.0
    %230 = vmatpush1.xpose.msra.mxu0 %v198
    %231 = vmatprep.subr.mxu0 0.0
    %232 = vmatpush1.xpose.msra.mxu0 %v195
    %233 = vmatprep.subr.mxu0 0.0
    %234 = vmatpush1.xpose.msra.mxu0 %v192
    %235 = vmatprep.subr.mxu0 0.0
    %236 = vmatpush2.xpose.msra.mxu0 0.0
    %237 = vmatprep.subr.mxu0 0.0
    %238 = vmatpush2.xpose.msra.mxu0 0.0
    %239 = vmatprep.subr.mxu0 0.0
    %240 = vmatpush2.xpose.msra.mxu0 0.0
    %241 = vmatprep.subr.mxu0 0.0
    %242 = vmatpush2.xpose.msra.mxu0 0.0
    %243 = vmatprep.subr.mxu0 0.0
    %244 = vmatpush2.xpose.msra.mxu0 0.0
    %245 = vmatprep.subr.mxu0 0.0
    %246 = vmatpush2.xpose.msra.mxu0 0.0
    %247 = vmatprep.subr.mxu0 0.0
    %248 = vmatpush2.xpose.msra.mxu0 0.0
    %249 = vmatprep.subr.mxu0 0.0
    %250 = vmatpush2.xpose.msra.mxu0 0.0
    %251 = vmatprep.subr.mxu0 0.0
    %252 = vmatpush2.xpose.msra.mxu0 0.0
    %253 = vmatprep.subr.mxu0 0.0
    %254 = vmatpush2.xpose.msra.mxu0 0.0
    %255 = vmatprep.subr.mxu0 0.0
    %256 = vmatpush2.xpose.msra.mxu0 0.0
    %257 = vmatprep.subr.mxu0 0.0
    %258 = vmatpush2.xpose.msra.mxu0 0.0
    %259 = vmatprep.subr.mxu0 0.0
    %260 = vmatpush2.xpose.msra.mxu0 0.0
    %261 = vmatprep.subr.mxu0 0.0
    %262 = vmatpush2.xpose.msra.mxu0 0.0
    %263 = vmatprep.subr.mxu0 0.0
    %264 = vmatpush2.xpose.msra.mxu0 0.0
    %265 = vmatprep.subr.mxu0 0.0
    %266 = vmatpush2.xpose.msra.mxu0 0.0
    %267 = vmatprep.mubr.f32.mxu0 0.0
    %268 = vmatmul.mubr.f32.gmra.mxu0 %v180
    %v269 = vpop.f32.mrf.mxu0
    %v270 = vadd.f32 %v176, %v269
    %v271 = vpop.f32.mrf.mxu0
    %272 = vmatprep.mubr.f32.mxu0 0.0
    %273 = vmatmul.mubr.f32.gmra.mxu0 %v183
    %v274 = vpop.f32.mrf.mxu0
    %v275 = vadd.f32 %v176, %v274
    %v276 = vpop.f32.mrf.mxu0
    %277 = vmatprep.mubr.f32.mxu0 0.0
    %278 = vmatmul.mubr.f32.gmra.mxu0 %v186
    %v279 = vpop.f32.mrf.mxu0
    %v280 = vadd.f32 %v176, %v279
    %v281 = vpop.f32.mrf.mxu0
    %282 = vmatprep.mubr.f32.mxu0 0.0
    %283 = vmatmul.mubr.f32.gmra.mxu0 %v189
    %v284 = vpop.f32.mrf.mxu0
    %v285 = vadd.f32 %v176, %v284
    %v286 = vpop.f32.mrf.mxu0
    %287 = vdwg.mxu0
    %v288 = vmul.f32 %v270, 0.1
    %v289 = vmul.f32 %v275, 0.1
    %v290 = vmul.f32 %v280, 0.1
    %v291 = vmul.f32 %v285, 0.1
    %v292 = vmax.f32 %v270, %v288
    %v293 = vmax.f32 %v275, %v289
    %v294 = vmax.f32 %v280, %v290
    %v295 = vmax.f32 %v285, %v291
    %v297 = vlaneseq
    %v298 = vshrl.u32 %v297, 7
    %v299 = vsub.s32 0, %v298
    %v300 = vrot.slane %v37, %v299
    %v303 = vsel %vm178, %v292, 0
    %v306 = vsel %vm178, %v293, 0
    %v309 = vsel %vm178, %v294, 0
    %v312 = vsel %vm178, %v295, 0
    %v315 = vsel %vm178, %v34, 0
    %317 = vmatprep.subr.mxu0 0.0
    %318 = vmatpush1.xpose.msra.mxu0 0.0
    %319 = vmatprep.subr.mxu0 0.0
    %320 = vmatpush1.xpose.msra.mxu0 0.0
    %321 = vmatprep.subr.mxu0 0.0
    %322 = vmatpush1.xpose.msra.mxu0 0.0
    %323 = vmatprep.subr.mxu0 0.0
    %324 = vmatpush1.xpose.msra.mxu0 0.0
    %325 = vmatprep.subr.mxu0 0.0
    %326 = vmatpush1.xpose.msra.mxu0 0.0
    %327 = vmatprep.subr.mxu0 0.0
    %328 = vmatpush1.xpose.msra.mxu0 0.0
    %329 = vmatprep.subr.mxu0 0.0
    %330 = vmatpush1.xpose.msra.mxu0 0.0
    %331 = vmatprep.subr.mxu0 0.0
    %332 = vmatpush1.xpose.msra.mxu0 0.0
    %333 = vmatprep.subr.mxu0 0.0
    %334 = vmatpush1.xpose.msra.mxu0 0.0
    %335 = vmatprep.subr.mxu0 0.0
    %336 = vmatpush1.xpose.msra.mxu0 0.0
    %337 = vmatprep.subr.mxu0 0.0
    %338 = vmatpush1.xpose.msra.mxu0 0.0
    %339 = vmatprep.subr.mxu0 0.0
    %340 = vmatpush1.xpose.msra.mxu0 0.0
    %341 = vmatprep.subr.mxu0 0.0
    %342 = vmatpush1.xpose.msra.mxu0 0.0
    %343 = vmatprep.subr.mxu0 0.0
    %344 = vmatpush1.xpose.msra.mxu0 0.0
    %345 = vmatprep.subr.mxu0 0.0
    %346 = vmatpush1.xpose.msra.mxu0 0.0
    %347 = vmatprep.subr.mxu0 0.0
    %348 = vmatpush1.xpose.msra.mxu0 %v315
    %349 = vmatprep.subr.mxu0 0.0
    %350 = vmatpush2.xpose.msra.mxu0 0.0
    %351 = vmatprep.subr.mxu0 0.0
    %352 = vmatpush2.xpose.msra.mxu0 0.0
    %353 = vmatprep.subr.mxu0 0.0
    %354 = vmatpush2.xpose.msra.mxu0 0.0
    %355 = vmatprep.subr.mxu0 0.0
    %356 = vmatpush2.xpose.msra.mxu0 0.0
    %357 = vmatprep.subr.mxu0 0.0
    %358 = vmatpush2.xpose.msra.mxu0 0.0
    %359 = vmatprep.subr.mxu0 0.0
    %360 = vmatpush2.xpose.msra.mxu0 0.0
    %361 = vmatprep.subr.mxu0 0.0
    %362 = vmatpush2.xpose.msra.mxu0 0.0
    %363 = vmatprep.subr.mxu0 0.0
    %364 = vmatpush2.xpose.msra.mxu0 0.0
    %365 = vmatprep.subr.mxu0 0.0
    %366 = vmatpush2.xpose.msra.mxu0 0.0
    %367 = vmatprep.subr.mxu0 0.0
    %368 = vmatpush2.xpose.msra.mxu0 0.0
    %369 = vmatprep.subr.mxu0 0.0
    %370 = vmatpush2.xpose.msra.mxu0 0.0
    %371 = vmatprep.subr.mxu0 0.0
    %372 = vmatpush2.xpose.msra.mxu0 0.0
    %373 = vmatprep.subr.mxu0 0.0
    %374 = vmatpush2.xpose.msra.mxu0 0.0
    %375 = vmatprep.subr.mxu0 0.0
    %376 = vmatpush2.xpose.msra.mxu0 0.0
    %377 = vmatprep.subr.mxu0 0.0
    %378 = vmatpush2.xpose.msra.mxu0 0.0
    %379 = vmatprep.subr.mxu0 0.0
    %380 = vmatpush2.xpose.msra.mxu0 0.0
    %381 = vmatprep.mubr.f32.mxu0 0.0
    %382 = vmatmul.mubr.f32.gmra.mxu0 %v303
    %v383 = vpop.f32.mrf.mxu0
    %v384 = vadd.f32 %v300, %v383
    %v385 = vpop.f32.mrf.mxu0
    %386 = vmatprep.mubr.f32.mxu0 0.0
    %387 = vmatmul.mubr.f32.gmra.mxu0 %v306
    %v388 = vpop.f32.mrf.mxu0
    %v389 = vadd.f32 %v300, %v388
    %v390 = vpop.f32.mrf.mxu0
    %391 = vmatprep.mubr.f32.mxu0 0.0
    %392 = vmatmul.mubr.f32.gmra.mxu0 %v309
    %v393 = vpop.f32.mrf.mxu0
    %v394 = vadd.f32 %v300, %v393
    %v395 = vpop.f32.mrf.mxu0
    %396 = vmatprep.mubr.f32.mxu0 0.0
    %397 = vmatmul.mubr.f32.gmra.mxu0 %v312
    %v398 = vpop.f32.mrf.mxu0
    %v399 = vadd.f32 %v300, %v398
    %v400 = vpop.f32.mrf.mxu0
    %401 = vdwg.mxu0
    %v402 = vmul.f32 %v384, 0.1
    %v403 = vmul.f32 %v389, 0.1
    %v404 = vmul.f32 %v394, 0.1
    %v405 = vmul.f32 %v399, 0.1
    %v406 = vmax.f32 %v384, %v402
    %v407 = vmax.f32 %v389, %v403
    %v408 = vmax.f32 %v394, %v404
    %v409 = vmax.f32 %v399, %v405
    %vm410 = vcmask 64512
    %411 = vst.msk [vmem:[%s7] sm:$0xff] %vm410, %v406
    %412 = vst.msk [vmem:[%s7 + $0x8] sm:$0xff] %vm410, %v407
    %413 = vst.msk [vmem:[%s7 + $0x10] sm:$0xff] %vm410, %v408
    %414 = vst.msk [vmem:[%s7 + $0x18] sm:$0xff] %vm410, %v409
  $region33: #{tpu_custom_call.1} parent=0 // pred_fallthru
    _
  // Predicated region
  $region34: #{tpu_custom_call.1} parent=0 // pred_check
    _
  $region35: #{tpu_custom_call.1} parent=0 // pred_check_branch
    %416 = sbr.rel (0) target = $region37
  $region36: #{tpu_custom_call.1} parent=0 // pred_region
    _
  $region37: #{tpu_custom_call.1} parent=0 // pred_fallthru
    _
  // Predicated region
  $region38: #{tpu_custom_call.1} parent=0 // pred_check
    _
  $region39: #{tpu_custom_call.1} parent=0 // pred_check_branch
    %418 = sbr.rel (0) target = $region41
  $region40: #{tpu_custom_call.1} parent=0 // pred_region
    _
  $region41: #{tpu_custom_call.1} parent=0 // pred_fallthru
    _

</llo_original>
